<compile_context>
chip_gen: v5e
topology: v5e:2x2
jax: 0.10.0
libtpu: 0.0.40
codegen_flags: <defaults>
</compile_context>

<pallas_src>
import functools

import jax
import jax.numpy as jnp
from jax import lax
from jax.experimental import pallas as pl
from jax.experimental.pallas import tpu as pltpu


def _ema_kernel(f_ref, last_ref, x_ref, out_ref, acc_ref, *, n_chunks):
    # Re-seed the carried EMA state at the first time block of each channel block.
    @pl.when(pl.program_id(1) == 0)
    def _():
        acc_ref[...] = last_ref[...].astype(jnp.float32)

    td = x_ref.shape[1]
    f = f_ref[...]                       # (1, TD) f32  sigmoid(factor)  (hoisted)
    omf = 1.0 - f                        # (1, TD)  -- no separate input stream
    f2 = f * f
    f4 = f2 * f2
    f8 = f4 * f4                         # (1, TD) cross-chunk decay f^8

    # Per-sublane-row constants for the 8-row decayed prefix scan (one-time per
    # grid step; tiny vs. the per-block HBM traffic).
    rows = jax.lax.broadcasted_iota(jnp.int32, (8, td), 0)
    fb = jnp.broadcast_to(f, (8, td))
    f2b = jnp.broadcast_to(f2, (8, td))
    f4b = jnp.broadcast_to(f4, (8, td))
    omf_b = jnp.broadcast_to(omf, (8, td))
    # fpow[r] = f^(r+1), exact binary decomposition of r (no pow/exp).
    fpow = (fb
            * jnp.where((rows & 1) > 0, fb, 1.0)
            * jnp.where((rows & 2) > 0, f2b, 1.0)
            * jnp.where((rows & 4) > 0, f4b, 1.0))

    def shift_down(v, span, mult):
        # result[r] = f^span * v[r - span] for r >= span, else 0.
        # The select (not a 0-multiplier mask) keeps wrapped-in stale-VMEM
        # garbage (possibly NaN/Inf in a ragged tail block) out of valid rows.
        return jnp.where(rows >= span, mult * pltpu.roll(v, span, 0), 0.0)

    def chunk(j, carry):                 # carry: (1, TD) f32 = x_mix just before chunk
        r0 = pl.multiple_of(j * 8, 8)
        u = x_ref[pl.ds(r0, 8), :].astype(jnp.float32) * omf_b        # (8, TD)
        # b[r] = sum_{s<=r} f^(r-s) * u[s]   (scan along sublanes; rolls -> XLU)
        b = u + shift_down(u, 1, fb)
        b = b + shift_down(b, 2, f2b)
        b = b + shift_down(b, 4, f4b)
        y = fpow * carry + b                                           # (8, TD)
        out_ref[pl.ds(r0, 8), :] = y.astype(out_ref.dtype)            # full-vreg store
        return f8 * carry + b[7:8, :]                                  # = y[7]

    acc_ref[...] = lax.fori_loop(0, n_chunks, chunk, acc_ref[...], unroll=2)


def ema_mixing(x, factor_param, x_mix_last=None, *, block_t=1024, block_lanes=512):
    """Functional EMAMixing forward. Returns (x_mix, new_x_mix_last)."""
    L, B, D = x.shape
    dtype = x.dtype
    if x_mix_last is None:
        x_mix_last = jnp.zeros((B, D), dtype=dtype)

    BD = B * D
    itemsize = jnp.dtype(dtype).itemsize

    # Hoist the sigmoid out of the kernel; tile B-major/D-minor to match
    # x.reshape(L, B*D) (lane index b*D + d -> factor[d]).
    f = jax.nn.sigmoid(factor_param.astype(jnp.float32))               # (D,)
    f2d = jnp.tile(f, B).reshape(1, BD)
    last2 = x_mix_last.reshape(1, BD)
    x2 = x.reshape(L, BD)                     # lane-dense fold of (B, D)

    # Degenerate tiny-sequence case only: pad time to one 8-row chunk.
    L_eff = L
    if L < 8:
        x2 = jnp.pad(x2, ((0, 8 - L), (0, 0)))
        L_eff = 8

    # ----- lane (channel) tiling: multiple of 128 dividing BD; >= 2 blocks when
    # possible so the "parallel" axis can feed both v7x TensorCores.
    if BD % 128 == 0:
        cap = min(block_lanes, BD)
        if BD >= 256:
            cap = min(cap, BD // 2)
        td = max(128, (cap // 128) * 128)
        while td > 128 and BD % td != 0:
            td -= 128
        TD = td
    else:
        TD = BD                                # full-dim block for small models

    # ----- time tiling: multiple of the dtype sublane pack, never exceeding L_eff
    pack = max(8, 32 // itemsize)              # 8 f32 / 16 bf16 / 32 int8
    tl = min(block_t, L_eff)
    tl = (tl // pack) * pack
    if tl == 0:
        tl = (min(block_t, L_eff) // 8) * 8
    TL = max(8, tl)

    # ----- VMEM-capacity-aware sizing (v7x: 64 MiB, v5e/v6e: 128 MiB).
    try:
        vmem_cap = int(pltpu.get_tpu_info().vmem_capacity_bytes)
    except Exception:
        vmem_cap = 64 * 2**20
    x_bufs = 3 if vmem_cap >= 100 * 2**20 else 2   # deeper x pipeline on big-VMEM parts
    tile_budget = int(0.45 * vmem_cap)
    while (x_bufs + 2) * TL * TD * itemsize > tile_budget and TL > 8:
        nt = ((TL // 2) // pack) * pack
        if nt == 0:
            nt = ((TL // 2) // 8) * 8
        TL = max(8, nt)

    grid = (pl.cdiv(BD, TD), pl.cdiv(L_eff, TL))

    est = ((x_bufs + 2) * TL * TD) * itemsize + 16 * TD * 4 + (1 << 20)
    vmem_limit = int(max(32 * 2**20, min(0.75 * vmem_cap, 3 * est)))

    x_map = lambda c, t: (t, c)
    if x_bufs > 2:
        try:
            x_spec = pl.BlockSpec((TL, TD), x_map, pipeline_mode=pl.Buffered(x_bufs))
        except (TypeError, AttributeError):     # older jax: default double buffering
            x_spec = pl.BlockSpec((TL, TD), x_map)
    else:
        x_spec = pl.BlockSpec((TL, TD), x_map)

    kernel = functools.partial(_ema_kernel, n_chunks=TL // 8)

    out2 = pl.pallas_call(
        kernel,
        out_shape=jax.ShapeDtypeStruct((L_eff, BD), dtype),
        grid_spec=pltpu.PrefetchScalarGridSpec(
            num_scalar_prefetch=0,
            grid=grid,
            in_specs=[
                pl.BlockSpec((1, TD), lambda c, t: (0, c)),   # f = sigmoid(factor)
                pl.BlockSpec((1, TD), lambda c, t: (0, c)),   # x_mix_last state
                x_spec,                                       # x time block
            ],
            out_specs=pl.BlockSpec((TL, TD), x_map),
            scratch_shapes=[pltpu.VMEM((1, TD), jnp.float32)],
        ),
        compiler_params=pltpu.CompilerParams(
            dimension_semantics=("parallel", "arbitrary"),   # time carries state
            vmem_limit_bytes=vmem_limit,
        ),
    )(f2d, last2, x2)

    x_mix = out2[:L].reshape(L, B, D)
    # NOTE: like the PyTorch module, the carried state is returned in x.dtype;
    # for very long bf16 segment chains an f32 side-output would drift less.
    return x_mix, x_mix[-1]


def ema_mixing_ref(x, factor_param, x_mix_last=None):
    """Pure-JAX reference mirroring the PyTorch FFT implementation."""
    L = x.shape[0]
    if x_mix_last is None:
        x_mix_last = jnp.zeros(x.shape[1:], dtype=x.dtype)
    factor = jax.nn.sigmoid(factor_param)
    factor_progression = factor ** jnp.arange(L)[:, None]                # (L, D)
    fft_fp = jnp.fft.rfft(factor_progression, n=2 * L, axis=0)
    fft_x = jnp.fft.rfft(x, n=2 * L, axis=0)
    conv = jnp.fft.irfft(fft_x * fft_fp[:, None, :], axis=0)[:L]
    x_mix = (x_mix_last[None] * factor_progression[:, None, :] * factor
             + (1.0 - factor) * conv)
    return x_mix.astype(x.dtype), x_mix[-1].astype(x.dtype)


if __name__ == "__main__":
    # B*D = 256 -> two 128-lane "parallel" channel blocks; L=20 exercises
    # multi-chunk blocks, multi-block carry and the ragged (masked) tail.
    L, B, D = 20, 4, 64
    key = jax.random.PRNGKey(0)
    k_param, k_x = jax.random.split(key)

    # nn.Parameter(torch.rand(dim)) -> uniform [0, 1)
    factor_param = jax.random.uniform(k_param, (D,), dtype=jnp.float32)
    x = jax.random.normal(k_x, (L, B, D), dtype=jnp.float32)

    # Segment 1, default tiling (TL=16 -> 2 chunks/block, ragged last block).
    y0, s0 = ema_mixing(x, factor_param, x_mix_last=None)
    # Segment 1, small time blocks (TL=8 -> 3 time blocks, cross-block carry).
    y1, s1 = ema_mixing(x, factor_param, x_mix_last=None, block_t=8)
    # Segment 2: exercise the carried-state path.
    y2, s2 = ema_mixing(x, factor_param, x_mix_last=s1, block_t=8)
    jax.block_until_ready((y0, s0, y1, s1, y2, s2))

    r1, rs1 = ema_mixing_ref(x, factor_param, x_mix_last=None)
    r2, rs2 = ema_mixing_ref(x, factor_param, x_mix_last=rs1)

    assert y0.shape == (L, B, D) and s0.shape == (B, D)
    assert jnp.allclose(y0, r1, rtol=1e-4, atol=1e-5)
    assert jnp.allclose(y1, r1, rtol=1e-4, atol=1e-5)
    assert jnp.allclose(s1, rs1, rtol=1e-4, atol=1e-5)
    assert jnp.allclose(y2, r2, rtol=1e-4, atol=1e-5)
    assert jnp.allclose(s2, rs2, rtol=1e-4, atol=1e-5)

    print("KERNEL_OK")
</pallas_src>

<mosaic_0001>
module attributes {stable_mosaic.version = 11 : i64} {
  func.func @_ema_kernel(%arg0: i32, %arg1: i32, %arg2: memref<1x128xf32, #tpu.memory_space<vmem>>, %arg3: memref<1x128xf32, #tpu.memory_space<vmem>>, %arg4: memref<16x128xf32, #tpu.memory_space<vmem>>, %arg5: memref<16x128xf32, #tpu.memory_space<vmem>>, %arg6: memref<1x128xf32, #tpu.memory_space<vmem>>) attributes {dimension_semantics = [#tpu.dimension_semantics<parallel>, #tpu.dimension_semantics<arbitrary>], iteration_bounds = array<i64: 2, 2>, scalar_prefetch = 0 : i64, scratch_operands = 1 : i64, tpu.core_type = #tpu.core_type<tc>, window_params = [{transform_indices = @transform_0, window_bounds = array<i64: 1, 128>}, {transform_indices = @transform_1, window_bounds = array<i64: 1, 128>}, {transform_indices = @transform_2, window_bounds = array<i64: 16, 128>}, {transform_indices = @transform_3, window_bounds = array<i64: 16, 128>}]} {
    %c0_i32 = arith.constant 0 : i32
    %0 = arith.cmpi eq, %arg1, %c0_i32 : i32
    %1 = arith.extui %0 : i1 to i32
    %c0_i32_0 = arith.constant 0 : i32
    %2 = arith.cmpi ne, %1, %c0_i32_0 : i32
    scf.if %2 {
      %c0_38 = arith.constant 0 : index
      %c0_39 = arith.constant 0 : index
      %109 = vector.load %arg3[%c0_38, %c0_39] : memref<1x128xf32, #tpu.memory_space<vmem>>, vector<1x128xf32>
      %c0_40 = arith.constant 0 : index
      %c0_41 = arith.constant 0 : index
      %110 = vector.load %arg6[%c0_40, %c0_41] : memref<1x128xf32, #tpu.memory_space<vmem>>, vector<1x128xf32>
      tpu.vector_store %arg6[%c0_40, %c0_41], %109 {strides = array<i32>} : memref<1x128xf32, #tpu.memory_space<vmem>>, vector<1x128xf32>,
    } else {
    }
    %c0 = arith.constant 0 : index
    %c0_1 = arith.constant 0 : index
    %3 = vector.load %arg2[%c0, %c0_1] : memref<1x128xf32, #tpu.memory_space<vmem>>, vector<1x128xf32>
    %cst = arith.constant 1.000000e+00 : f32
    %4 = vector.broadcast %cst : f32 to vector<1x128xf32>
    %5 = arith.subf %4, %3 : vector<1x128xf32>
    %6 = arith.mulf %3, %3 : vector<1x128xf32>
    %7 = arith.mulf %6, %6 : vector<1x128xf32>
    %8 = arith.mulf %7, %7 : vector<1x128xf32>
    %9 = tpu.iota {dimensions = array<i32: 0>} : vector<8x128xi32>
    %10 = vector.shape_cast %3 : vector<1x128xf32> to vector<1x128xf32>
    %11 = vector.broadcast %10 : vector<1x128xf32> to vector<8x128xf32>
    %12 = vector.shape_cast %6 : vector<1x128xf32> to vector<1x128xf32>
    %13 = vector.broadcast %12 : vector<1x128xf32> to vector<8x128xf32>
    %14 = vector.shape_cast %7 : vector<1x128xf32> to vector<1x128xf32>
    %15 = vector.broadcast %14 : vector<1x128xf32> to vector<8x128xf32>
    %16 = vector.shape_cast %5 : vector<1x128xf32> to vector<1x128xf32>
    %17 = vector.broadcast %16 : vector<1x128xf32> to vector<8x128xf32>
    %c1_i32 = arith.constant 1 : i32
    %18 = vector.broadcast %c1_i32 : i32 to vector<8x128xi32>
    %19 = arith.andi %9, %18 : vector<8x128xi32>
    %c0_i32_2 = arith.constant 0 : i32
    %20 = vector.broadcast %c0_i32_2 : i32 to vector<8x128xi32>
    %21 = arith.cmpi sgt, %19, %20 : vector<8x128xi32>
    %cst_3 = arith.constant 1.000000e+00 : f32
    %22 = vector.broadcast %cst_3 : f32 to vector<8x128xf32>
    %23 = arith.select %21, %11, %22 : vector<8x128xi1>, vector<8x128xf32>
    %24 = arith.mulf %11, %23 : vector<8x128xf32>
    %c2_i32 = arith.constant 2 : i32
    %25 = vector.broadcast %c2_i32 : i32 to vector<8x128xi32>
    %26 = arith.andi %9, %25 : vector<8x128xi32>
    %c0_i32_4 = arith.constant 0 : i32
    %27 = vector.broadcast %c0_i32_4 : i32 to vector<8x128xi32>
    %28 = arith.cmpi sgt, %26, %27 : vector<8x128xi32>
    %cst_5 = arith.constant 1.000000e+00 : f32
    %29 = vector.broadcast %cst_5 : f32 to vector<8x128xf32>
    %30 = arith.select %28, %13, %29 : vector<8x128xi1>, vector<8x128xf32>
    %31 = arith.mulf %24, %30 : vector<8x128xf32>
    %c4_i32 = arith.constant 4 : i32
    %32 = vector.broadcast %c4_i32 : i32 to vector<8x128xi32>
    %33 = arith.andi %9, %32 : vector<8x128xi32>
    %c0_i32_6 = arith.constant 0 : i32
    %34 = vector.broadcast %c0_i32_6 : i32 to vector<8x128xi32>
    %35 = arith.cmpi sgt, %33, %34 : vector<8x128xi32>
    %cst_7 = arith.constant 1.000000e+00 : f32
    %36 = vector.broadcast %cst_7 : f32 to vector<8x128xf32>
    %37 = arith.select %35, %15, %36 : vector<8x128xi1>, vector<8x128xf32>
    %38 = arith.mulf %31, %37 : vector<8x128xf32>
    %c0_8 = arith.constant 0 : index
    %c0_9 = arith.constant 0 : index
    %39 = vector.load %arg6[%c0_8, %c0_9] : memref<1x128xf32, #tpu.memory_space<vmem>>, vector<1x128xf32>
    %c0_i32_10 = arith.constant 0 : i32
    %c8_i32 = arith.constant 8 : i32
    %40 = arith.muli %c0_i32_10, %c8_i32 : i32
    %41 = tpu.assume_multiple %40, 8 : i32
    %42 = arith.index_cast %41 : i32 to index
    %c0_11 = arith.constant 0 : index
    %43 = vector.load %arg4[%42, %c0_11] : memref<16x128xf32, #tpu.memory_space<vmem>>, vector<8x128xf32>
    %44 = arith.mulf %43, %17 : vector<8x128xf32>
    %c1_i32_12 = arith.constant 1 : i32
    %45 = vector.broadcast %c1_i32_12 : i32 to vector<8x128xi32>
    %46 = arith.cmpi sge, %9, %45 : vector<8x128xi32>
    %c1_i32_13 = arith.constant 1 : i32
    %47 = tpu.dynamic_rotate %44 by %c1_i32_13 dim 0 : vector<8x128xf32>, i32 -> vector<8x128xf32>
    %48 = arith.mulf %11, %47 : vector<8x128xf32>
    %cst_14 = arith.constant 0.000000e+00 : f32
    %49 = vector.broadcast %cst_14 : f32 to vector<8x128xf32>
    %50 = arith.select %46, %48, %49 : vector<8x128xi1>, vector<8x128xf32>
    %51 = arith.addf %44, %50 : vector<8x128xf32>
    %c2_i32_15 = arith.constant 2 : i32
    %52 = vector.broadcast %c2_i32_15 : i32 to vector<8x128xi32>
    %53 = arith.cmpi sge, %9, %52 : vector<8x128xi32>
    %c2_i32_16 = arith.constant 2 : i32
    %54 = tpu.dynamic_rotate %51 by %c2_i32_16 dim 0 : vector<8x128xf32>, i32 -> vector<8x128xf32>
    %55 = arith.mulf %13, %54 : vector<8x128xf32>
    %cst_17 = arith.constant 0.000000e+00 : f32
    %56 = vector.broadcast %cst_17 : f32 to vector<8x128xf32>
    %57 = arith.select %53, %55, %56 : vector<8x128xi1>, vector<8x128xf32>
    %58 = arith.addf %51, %57 : vector<8x128xf32>
    %c4_i32_18 = arith.constant 4 : i32
    %59 = vector.broadcast %c4_i32_18 : i32 to vector<8x128xi32>
    %60 = arith.cmpi sge, %9, %59 : vector<8x128xi32>
    %c4_i32_19 = arith.constant 4 : i32
    %61 = tpu.dynamic_rotate %58 by %c4_i32_19 dim 0 : vector<8x128xf32>, i32 -> vector<8x128xf32>
    %62 = arith.mulf %15, %61 : vector<8x128xf32>
    %cst_20 = arith.constant 0.000000e+00 : f32
    %63 = vector.broadcast %cst_20 : f32 to vector<8x128xf32>
    %64 = arith.select %60, %62, %63 : vector<8x128xi1>, vector<8x128xf32>
    %65 = arith.addf %58, %64 : vector<8x128xf32>
    %66 = vector.broadcast %39 : vector<1x128xf32> to vector<8x128xf32>
    %67 = arith.mulf %38, %66 : vector<8x128xf32>
    %68 = arith.addf %67, %65 : vector<8x128xf32>
    %69 = arith.index_cast %41 : i32 to index
    %c0_21 = arith.constant 0 : index
    %70 = vector.load %arg5[%69, %c0_21] : memref<16x128xf32, #tpu.memory_space<vmem>>, vector<8x128xf32>
    tpu.vector_store %arg5[%69, %c0_21], %68 {strides = array<i32>} : memref<16x128xf32, #tpu.memory_space<vmem>>, vector<8x128xf32>,
    %71 = arith.mulf %8, %39 : vector<1x128xf32>
    %72 = vector.extract_strided_slice %65 {offsets = [7, 0], sizes = [1, 128], strides = [1, 1]} : vector<8x128xf32> to vector<1x128xf32>
    %73 = arith.addf %71, %72 : vector<1x128xf32>
    %c1_i32_22 = arith.constant 1 : i32
    %c8_i32_23 = arith.constant 8 : i32
    %74 = arith.muli %c1_i32_22, %c8_i32_23 : i32
    %75 = tpu.assume_multiple %74, 8 : i32
    %76 = arith.index_cast %75 : i32 to index
    %c0_24 = arith.constant 0 : index
    %77 = vector.load %arg4[%76, %c0_24] : memref<16x128xf32, #tpu.memory_space<vmem>>, vector<8x128xf32>
    %78 = arith.mulf %77, %17 : vector<8x128xf32>
    %c1_i32_25 = arith.constant 1 : i32
    %79 = vector.broadcast %c1_i32_25 : i32 to vector<8x128xi32>
    %80 = arith.cmpi sge, %9, %79 : vector<8x128xi32>
    %c1_i32_26 = arith.constant 1 : i32
    %81 = tpu.dynamic_rotate %78 by %c1_i32_26 dim 0 : vector<8x128xf32>, i32 -> vector<8x128xf32>
    %82 = arith.mulf %11, %81 : vector<8x128xf32>
    %cst_27 = arith.constant 0.000000e+00 : f32
    %83 = vector.broadcast %cst_27 : f32 to vector<8x128xf32>
    %84 = arith.select %80, %82, %83 : vector<8x128xi1>, vector<8x128xf32>
    %85 = arith.addf %78, %84 : vector<8x128xf32>
    %c2_i32_28 = arith.constant 2 : i32
    %86 = vector.broadcast %c2_i32_28 : i32 to vector<8x128xi32>
    %87 = arith.cmpi sge, %9, %86 : vector<8x128xi32>
    %c2_i32_29 = arith.constant 2 : i32
    %88 = tpu.dynamic_rotate %85 by %c2_i32_29 dim 0 : vector<8x128xf32>, i32 -> vector<8x128xf32>
    %89 = arith.mulf %13, %88 : vector<8x128xf32>
    %cst_30 = arith.constant 0.000000e+00 : f32
    %90 = vector.broadcast %cst_30 : f32 to vector<8x128xf32>
    %91 = arith.select %87, %89, %90 : vector<8x128xi1>, vector<8x128xf32>
    %92 = arith.addf %85, %91 : vector<8x128xf32>
    %c4_i32_31 = arith.constant 4 : i32
    %93 = vector.broadcast %c4_i32_31 : i32 to vector<8x128xi32>
    %94 = arith.cmpi sge, %9, %93 : vector<8x128xi32>
    %c4_i32_32 = arith.constant 4 : i32
    %95 = tpu.dynamic_rotate %92 by %c4_i32_32 dim 0 : vector<8x128xf32>, i32 -> vector<8x128xf32>
    %96 = arith.mulf %15, %95 : vector<8x128xf32>
    %cst_33 = arith.constant 0.000000e+00 : f32
    %97 = vector.broadcast %cst_33 : f32 to vector<8x128xf32>
    %98 = arith.select %94, %96, %97 : vector<8x128xi1>, vector<8x128xf32>
    %99 = arith.addf %92, %98 : vector<8x128xf32>
    %100 = vector.broadcast %73 : vector<1x128xf32> to vector<8x128xf32>
    %101 = arith.mulf %38, %100 : vector<8x128xf32>
    %102 = arith.addf %101, %99 : vector<8x128xf32>
    %103 = arith.index_cast %75 : i32 to index
    %c0_34 = arith.constant 0 : index
    %104 = vector.load %arg5[%103, %c0_34] : memref<16x128xf32, #tpu.memory_space<vmem>>, vector<8x128xf32>
    tpu.vector_store %arg5[%103, %c0_34], %102 {strides = array<i32>} : memref<16x128xf32, #tpu.memory_space<vmem>>, vector<8x128xf32>,
    %105 = arith.mulf %8, %73 : vector<1x128xf32>
    %106 = vector.extract_strided_slice %99 {offsets = [7, 0], sizes = [1, 128], strides = [1, 1]} : vector<8x128xf32> to vector<1x128xf32>
    %107 = arith.addf %105, %106 : vector<1x128xf32>
    %c2_i32_35 = arith.constant 2 : i32
    %c0_36 = arith.constant 0 : index
    %c0_37 = arith.constant 0 : index
    %108 = vector.load %arg6[%c0_36, %c0_37] : memref<1x128xf32, #tpu.memory_space<vmem>>, vector<1x128xf32>
    tpu.vector_store %arg6[%c0_36, %c0_37], %107 {strides = array<i32>} : memref<1x128xf32, #tpu.memory_space<vmem>>, vector<1x128xf32>,
    return
  }
  func.func @transform_0(%arg0: i32, %arg1: i32) -> (i32, i32) {
    %c0_i32 = arith.constant 0 : i32
    %c0_i32_0 = arith.constant 0 : i32
    return %c0_i32, %arg0 : i32, i32
  }
  func.func @transform_1(%arg0: i32, %arg1: i32) -> (i32, i32) {
    %c0_i32 = arith.constant 0 : i32
    %c0_i32_0 = arith.constant 0 : i32
    return %c0_i32, %arg0 : i32, i32
  }
  func.func @transform_2(%arg0: i32, %arg1: i32) -> (i32, i32) {
    %c0_i32 = arith.constant 0 : i32
    return %arg1, %arg0 : i32, i32
  }
  func.func @transform_3(%arg0: i32, %arg1: i32) -> (i32, i32) {
    %c0_i32 = arith.constant 0 : i32
    return %arg1, %arg0 : i32, i32
  }
}

</mosaic_0001>

<llo_original>
// kernel: tpu_custom_call.1
$region0: #{tpu_custom_call.1}
  #allocation0 [shape = 'u32[]', space=smem, size = 0x4, offset = 0x4, fixed_abs, tag = 'smem constant byte address 0x4 - core index']
  #allocation1 [shape = 'u32[72,128]{1,0:T(1,128)}', space=vmem, size = 0x9000, scoped, tag = 'internal scratch']
  #allocation2 [shape = 'f32[1,128]{1,0:T(1,128)}', space=vmem, size = 0x200, scoped, tag = 'scratch operand']
  %s0 = inlined_call_operand.hbm [shape: f32[1,256], index: 0, kind: input, shape index: {}]
  %s1 = inlined_call_operand.hbm [shape: f32[1,256], index: 1, kind: input, shape index: {}]
  %s2 = inlined_call_operand.hbm [shape: f32[20,256], index: 2, kind: input, shape index: {}]
  %s3 = inlined_call_operand.hbm [shape: f32[20,256], index: 3, kind: output, shape index: {}]
  %s4 = sld [smem:[#allocation0]]
  $region61: #{tpu_custom_call.1} parent=0
    _
  %s6 = ssub.s32 1, %s4
  %s7 = scalar_select 0, %s6, %s4
  $region1: #{tpu_custom_call.1} parent=0
    #allocation3 [shape = 'u8[1024]{0}', space=vmem, size = 0x400, scoped, tag = 'input window, operand 0']
    #allocation4 [shape = 's32[2]{0}', space=sflag, size = 0x8, scoped, tag = 'scoped memory for tpu_custom_call.1']
    #allocation5 [shape = 's32[2]{0}', space=sflag, size = 0x8, scoped, tag = 'scoped memory for tpu_custom_call.1']
    #allocation6 [shape = 'u8[1024]{0}', space=vmem, size = 0x400, scoped, tag = 'input window, operand 1']
    #allocation7 [shape = 's32[2]{0}', space=sflag, size = 0x8, scoped, tag = 'scoped memory for tpu_custom_call.1']
    #allocation8 [shape = 'u8[16384]{0}', space=vmem, size = 0x4000, scoped, tag = 'input window, operand 2']
    #allocation9 [shape = 'u8[16384]{0}', space=vmem, size = 0x4000, scoped, tag = 'output window, operand 0']
    %8 = vsyncpa [#allocation4], 0
    %s9 = scalar_lea.sflag [#allocation4], 1
    %10 = vsyncpa %s9, 0
    %11 = vsyncpa [#allocation7], 0
    %s12 = scalar_lea.sflag [#allocation7], 1
    %13 = vsyncpa %s12, 0
    %14 = vsyncpa [#allocation5], 0
    %s15 = scalar_lea.sflag [#allocation5], 1
    %16 = vsyncpa %s15, 0
    loop: start=0, step=1, limit=6
    $region2: #{tpu_custom_call.1} parent=1 // loop_pre_header
      _
    $region3: #{tpu_custom_call.1} parent=1 // loop_header
      %s18 = sphi 0, %s22
      %p19 = scmp.ge.s32.totalorder %s18, 6
      %s25 = sphi 0, %s37
      %s26 = sphi 0, %s33
      %s27 = sphi 0, %s25
      %s28 = sphi 0, %s26
      %s29 = sphi 0, %s27
      %s30 = sphi 0, %s28
      %s40 = sphi 0, %s42
      %s43 = sphi 0, %s40
      %s44 = sphi 0, %s43
      %s60 = sphi 0, %s44
      %s66 = sphi 0, %s68
      %s69 = sphi 0, %s66
      %s70 = sphi 0, %s69
      %s86 = sphi 0, %s70
      %s94 = sphi 0, %s96
      %s97 = sphi 0, %s94
      %s98 = sphi 0, %s97
      %s114 = sphi 0, %s98
      %s122 = sphi 0, %s124
      %s125 = sphi 0, %s122
      %s126 = sphi 0, %s125
      %s142 = sphi 0, %s126
    $region4: #{tpu_custom_call.1} parent=1 // loop_header_branch
      %21 = sbr.rel (%p19) target = $region8
    $region5: #{tpu_custom_call.1} parent=1 // loop_body
      %s23 = ssub.s32 %s18, 1
      %s24 = ssub.s32 %s18, 2
      %s31 = sadd.s32 1, %s26
      %p32 = scmp.ge.s32.totalorder %s31, 2
      %s33 = scalar_select %p32, 0, %s31
      %s34 = sadd.s32 1, %s25
      %s35 = scalar_select %p32, %s34, %s25
      %p36 = scmp.ge.s32.totalorder %s35, 2
      %s37 = scalar_select %p36, 0, %s35
      %s38 = ssub.s32 %s25, %s37
      %p39 = scmp.eq.s32.totalorder %s38, 0
      %s41 = sadd.s32 %s40, 1
      %s42 = scalar_select %p39, %s40, %s41
      %p45 = pneg %p39
      %p46 = scmp.eq.s32.totalorder %s18, 3
      %p47 = por %p45, %p46
      %p48 = scmp.ne.s32.totalorder %s40, %s43
      %p49 = scmp.eq.s32.totalorder %s18, 0
      %p50 = por %p48, %p49
      %p51 = scmp.ne.s32.totalorder %s40, %s43
      %p52 = scmp.eq.s32.totalorder %s23, 3
      %p53 = por %p51, %p52
      %p54 = scmp.ne.s32.totalorder %s43, %s44
      %p55 = scmp.eq.s32.totalorder %s23, 0
      %p56 = por %p54, %p55
      %p57 = scmp.ne.s32.totalorder %s43, %s44
      %p58 = scmp.eq.s32.totalorder %s24, 3
      %p59 = por %p57, %p58
      %p61 = scmp.ne.s32.totalorder %s44, %s60
      %p62 = scmp.eq.s32.totalorder %s24, 0
      %p63 = por %p61, %p62
      %s64 = ssub.s32 %s25, %s37
      %p65 = scmp.eq.s32.totalorder %s64, 0
      %s67 = sadd.s32 %s66, 1
      %s68 = scalar_select %p65, %s66, %s67
      %p71 = pneg %p65
      %p72 = scmp.eq.s32.totalorder %s18, 3
      %p73 = por %p71, %p72
      %p74 = scmp.ne.s32.totalorder %s66, %s69
      %p75 = scmp.eq.s32.totalorder %s18, 0
      %p76 = por %p74, %p75
      %p77 = scmp.ne.s32.totalorder %s66, %s69
      %p78 = scmp.eq.s32.totalorder %s23, 3
      %p79 = por %p77, %p78
      %p80 = scmp.ne.s32.totalorder %s69, %s70
      %p81 = scmp.eq.s32.totalorder %s23, 0
      %p82 = por %p80, %p81
      %p83 = scmp.ne.s32.totalorder %s69, %s70
      %p84 = scmp.eq.s32.totalorder %s24, 3
      %p85 = por %p83, %p84
      %p87 = scmp.ne.s32.totalorder %s70, %s86
      %p88 = scmp.eq.s32.totalorder %s24, 0
      %p89 = por %p87, %p88
      %s90 = ssub.s32 %s26, %s33
      %s91 = ssub.s32 %s25, %s37
      %s92 = sor.u32 %s90, %s91
      %p93 = scmp.eq.s32.totalorder %s92, 0
      %s95 = sadd.s32 %s94, 1
      %s96 = scalar_select %p93, %s94, %s95
      %p99 = pneg %p93
      %p100 = scmp.eq.s32.totalorder %s18, 3
      %p101 = por %p99, %p100
      %p102 = scmp.ne.s32.totalorder %s94, %s97
      %p103 = scmp.eq.s32.totalorder %s18, 0
      %p104 = por %p102, %p103
      %p105 = scmp.ne.s32.totalorder %s94, %s97
      %p106 = scmp.eq.s32.totalorder %s23, 3
      %p107 = por %p105, %p106
      %p108 = scmp.ne.s32.totalorder %s97, %s98
      %p109 = scmp.eq.s32.totalorder %s23, 0
      %p110 = por %p108, %p109
      %p111 = scmp.ne.s32.totalorder %s97, %s98
      %p112 = scmp.eq.s32.totalorder %s24, 3
      %p113 = por %p111, %p112
      %p115 = scmp.ne.s32.totalorder %s98, %s114
      %p116 = scmp.eq.s32.totalorder %s24, 0
      %p117 = por %p115, %p116
      %s118 = ssub.s32 %s26, %s33
      %s119 = ssub.s32 %s25, %s37
      %s120 = sor.u32 %s118, %s119
      %p121 = scmp.eq.s32.totalorder %s120, 0
      %s123 = sadd.s32 %s122, 1
      %s124 = scalar_select %p121, %s122, %s123
      %p127 = pneg %p121
      %p128 = scmp.eq.s32.totalorder %s18, 3
      %p129 = por %p127, %p128
      %p130 = scmp.ne.s32.totalorder %s122, %s125
      %p131 = scmp.eq.s32.totalorder %s18, 0
      %p132 = por %p130, %p131
      %p133 = scmp.ne.s32.totalorder %s122, %s125
      %p134 = scmp.eq.s32.totalorder %s23, 3
      %p135 = por %p133, %p134
      %p136 = scmp.ne.s32.totalorder %s125, %s126
      %p137 = scmp.eq.s32.totalorder %s23, 0
      %p138 = por %p136, %p137
      %p139 = scmp.ne.s32.totalorder %s125, %s126
      %p140 = scmp.eq.s32.totalorder %s24, 3
      %p141 = por %p139, %p140
      %p143 = scmp.ne.s32.totalorder %s126, %s142
      %p144 = scmp.eq.s32.totalorder %s24, 0
      %p145 = por %p143, %p144
      %p146 = scmp.le.s32.totalorder 1, %s18
      %p147 = scmp.lt.s32.totalorder %s18, 5
      %p148 = pnand %p146, %p147
      %p149 = pneg %p148
      // Predicated region
      $region9: #{tpu_custom_call.1} parent=5 // pred_check
        _
      $region10: #{tpu_custom_call.1} parent=5 // pred_check_branch
        %151 = sbr.rel (%p148) target = $region12
      $region11: #{tpu_custom_call.1} parent=5 // pred_region
        %s152 = ssub.s32 %s18, 1
      $region12: #{tpu_custom_call.1} parent=5 // pred_fallthru
        _
      %p153 = scmp.lt.s32.totalorder %s18, 4
      // Predicated region
      $region13: #{tpu_custom_call.1} parent=5 // pred_check
        %p154 = pneg %p153
      $region14: #{tpu_custom_call.1} parent=5 // pred_check_branch
        %156 = sbr.rel (%p154) target = $region16
      $region15: #{tpu_custom_call.1} parent=5 // pred_region
        // Predicated region
        $region17: #{tpu_custom_call.1} parent=15 // pred_check
          %p157 = pneg %p50
        $region18: #{tpu_custom_call.1} parent=15 // pred_check_branch
          %159 = sbr.rel (%p157) target = $region20
        $region19: #{tpu_custom_call.1} parent=15 // pred_region
          %s160 = sand.u32 %s40, 1
          %s161 = scalar_lea.sflag [#allocation4], %s160
          %s162 = sand.u32 %s40, 1
          %s163 = scalar_lea.vmem [#allocation3], %s162
          %165 = vsyncadd %s161, 0
          %s166 = scalar_lea.hbm %s0, %s25
          %s168 = sshll.u32 %s166, 4
          %s169 = int_to_ptr.hbm [resolvable:$true] %s168
          %s170 = sshll.u32 %s163, 4
          %s171 = int_to_ptr.vmem [resolvable:$true] %s170
          %173 = dma.hbm_to_vmem [thread:$0]  %s169, 16, %s171, %s161
        $region20: #{tpu_custom_call.1} parent=15 // pred_fallthru
          _
        // Predicated region
        $region21: #{tpu_custom_call.1} parent=15 // pred_check
          %p174 = pneg %p76
        $region22: #{tpu_custom_call.1} parent=15 // pred_check_branch
          %176 = sbr.rel (%p174) target = $region24
        $region23: #{tpu_custom_call.1} parent=15 // pred_region
          %s177 = sand.u32 %s18, 1
          %s178 = scalar_lea.sflag [#allocation7], %s177
          %s179 = sand.u32 %s66, 1
          %s180 = scalar_lea.vmem [#allocation6], %s179
          %182 = vsyncadd %s178, 0
          %s183 = scalar_lea.hbm %s1, %s25
          %s185 = sshll.u32 %s183, 4
          %s186 = int_to_ptr.hbm [resolvable:$true] %s185
          %s187 = sshll.u32 %s180, 4
          %s188 = int_to_ptr.vmem [resolvable:$true] %s187
          %190 = dma.hbm_to_vmem [thread:$0]  %s186, 16, %s188, %s178
        $region24: #{tpu_custom_call.1} parent=15 // pred_fallthru
          _
        // Predicated region
        $region25: #{tpu_custom_call.1} parent=15 // pred_check
          %p191 = pneg %p104
        $region26: #{tpu_custom_call.1} parent=15 // pred_check_branch
          %193 = sbr.rel (%p191) target = $region28
        $region27: #{tpu_custom_call.1} parent=15 // pred_region
          %s194 = sand.u32 %s18, 1
          %s195 = scalar_lea.sflag [#allocation7], %s194
          %s196 = sand.u32 %s94, 1
          %s197 = smul.addr %s196, 16
          %s198 = scalar_lea.vmem [#allocation8], %s197
          %s199 = smul.u32 2, %s26
          %s200 = ssub.s32 3, %s199
          %p201 = scmp.lt.s32.totalorder %s200, 2
          %s202 = scalar_select %p201, %s200, 2
          %s203 = smul.u32 8, %s202
          %s204 = ssub.s32 16, %s203
          %s205 = sshll.u32 %s204, 4
          %206 = vsyncadd %s195, %s205
          %p207 = scmp.ne.s32.totalorder 0, %s203
          %s208 = smul.addr %s199, 2
          %s209 = sadd.s32 %s25, %s208
          %s210 = smul.addr %s209, 8
          %s211 = scalar_lea.hbm %s2, %s210
          %s212 = smul.u32 8, %s202
          %s213 = sshll.u32 %s211, 4
          %s214 = int_to_ptr.hbm [resolvable:$true] %s213
          %s215 = sshll.u32 %s198, 4
          %s216 = int_to_ptr.vmem [resolvable:$true] %s215
          %s217 = sshll.u32 %s212, 4
          %221 = dma.hbm_to_vmem [thread:$0]  (%p207), %s214, %s217, %s216, %s195, 256, 128, 8
        $region28: #{tpu_custom_call.1} parent=15 // pred_fallthru
          _
      $region16: #{tpu_custom_call.1} parent=5 // pred_fallthru
        _
      %p222 = scmp.le.s32.totalorder 1, %s18
      %p223 = scmp.lt.s32.totalorder %s18, 5
      %p224 = pnand %p222, %p223
      %p225 = pneg %p224
      // Predicated region
      $region29: #{tpu_custom_call.1} parent=5 // pred_check
        _
      $region30: #{tpu_custom_call.1} parent=5 // pred_check_branch
        %227 = sbr.rel (%p224) target = $region32
      $region31: #{tpu_custom_call.1} parent=5 // pred_region
        %s228 = ssub.s32 %s18, 1
        %s229 = sand.u32 %s43, 1
        %s230 = scalar_lea.sflag [#allocation4], %s229
        %s231 = sand.u32 %s43, 1
        %s232 = scalar_lea.vmem [#allocation3], %s231
        // Predicated region
        $region33: #{tpu_custom_call.1} parent=31 // pred_check
          %p233 = pneg %p56
        $region34: #{tpu_custom_call.1} parent=31 // pred_check_branch
          %235 = sbr.rel (%p233) target = $region36
        $region35: #{tpu_custom_call.1} parent=31 // pred_region
          %237 = dma.done %s230, 16
        $region36: #{tpu_custom_call.1} parent=31 // pred_fallthru
          _
        %s238 = sand.u32 %s23, 1
        %s239 = scalar_lea.sflag [#allocation7], %s238
        %s240 = sand.u32 %s69, 1
        %s241 = scalar_lea.vmem [#allocation6], %s240
        // Predicated region
        $region37: #{tpu_custom_call.1} parent=31 // pred_check
          %p242 = pneg %p82
        $region38: #{tpu_custom_call.1} parent=31 // pred_check_branch
          %244 = sbr.rel (%p242) target = $region40
        $region39: #{tpu_custom_call.1} parent=31 // pred_region
          %246 = dma.done %s239, 16
        $region40: #{tpu_custom_call.1} parent=31 // pred_fallthru
          _
        %s247 = sand.u32 %s23, 1
        %s248 = scalar_lea.sflag [#allocation7], %s247
        %s249 = sand.u32 %s97, 1
        %s250 = smul.addr %s249, 16
        %s251 = scalar_lea.vmem [#allocation8], %s250
        // Predicated region
        $region41: #{tpu_custom_call.1} parent=31 // pred_check
          %p252 = pneg %p110
        $region42: #{tpu_custom_call.1} parent=31 // pred_check_branch
          %254 = sbr.rel (%p252) target = $region44
        $region43: #{tpu_custom_call.1} parent=31 // pred_region
          %256 = dma.done %s248, 256
        $region44: #{tpu_custom_call.1} parent=31 // pred_fallthru
          _
        %s257 = sand.u32 %s43, 1
        %s258 = scalar_lea.sflag [#allocation4], %s257
        %s259 = sand.u32 %s43, 1
        %s260 = scalar_lea.vmem [#allocation3], %s259
        %p261 = pneg %p56
        %p262 = pneg %p53
        %s263 = sand.u32 %s23, 1
        %s264 = scalar_lea.sflag [#allocation7], %s263
        %s265 = sand.u32 %s69, 1
        %s266 = scalar_lea.vmem [#allocation6], %s265
        %p267 = pneg %p82
        %p268 = pneg %p79
        %s269 = sand.u32 %s23, 1
        %s270 = scalar_lea.sflag [#allocation7], %s269
        %s271 = sand.u32 %s97, 1
        %s272 = smul.addr %s271, 16
        %s273 = scalar_lea.vmem [#allocation8], %s272
        %p274 = pneg %p110
        %p275 = pneg %p107
        %p276 = pneg %p138
        %p277 = pneg %p135
        %s278 = sand.u32 %s125, 1
        %s279 = scalar_lea.sflag [#allocation5], %s278
        %s280 = sand.u32 %s125, 1
        %s281 = smul.addr %s280, 16
        %s282 = scalar_lea.vmem [#allocation9], %s281
        %s283 = smul.u32 2, %s28
        %s284 = ssub.s32 3, %s283
        %p285 = scmp.lt.s32.totalorder %s284, 2
        %s286 = scalar_select %p285, %s284, 2
        %s287 = smul.u32 8, %s286
        %s288 = smul.u32 2, %s28
        %s289 = ssub.s32 3, %s288
        %p290 = scmp.lt.s32.totalorder %s289, 2
        %s291 = scalar_select %p290, %s289, 2
        %s292 = smul.u32 8, %s291
        %p293 = scmp.eq.s32.totalorder %s28, 0
        // Predicated region
        $region45: #{tpu_custom_call.1} parent=31 // pred_check
          %p294 = pneg %p293
        $region46: #{tpu_custom_call.1} parent=31 // pred_check_branch
          %296 = sbr.rel (%p294) target = $region48
        $region47: #{tpu_custom_call.1} parent=31 // pred_region
          %v297 = vld [vmem:[%s241] sm:$0x1]
          %298 = vst [vmem:[#allocation2] sm:$0x1] %v297
        $region48: #{tpu_custom_call.1} parent=31 // pred_fallthru
          _
        %v299 = vld [vmem:[%s232] sm:$0x1]
        %v300 = vsub.f32 1.0, %v299
        %v301 = vmul.f32 %v299, %v299
        %v302 = vmul.f32 %v301, %v301
        %v303 = vmul.f32 %v302, %v302
        %v304 = vlaneseq
        %v305 = vshrl.u32 %v304, 7
        %v307 = vperm.slane %v299, 0
        %v310 = vperm.slane %v301, 0
        %v313 = vperm.slane %v302, 0
        %v316 = vperm.slane %v300, 0
        %v318 = vand.u32 %v305, 1
        %vm319 = vcmp.gt.s32.totalorder %v318, 0
        %v320 = vsel %vm319, %v307, 1.0
        %v321 = vmul.f32 %v307, %v320
        %v322 = vand.u32 %v305, 2
        %vm323 = vcmp.gt.s32.totalorder %v322, 0
        %v324 = vsel %vm323, %v310, 1.0
        %v325 = vmul.f32 %v321, %v324
        %v326 = vand.u32 %v305, 4
        %vm327 = vcmp.gt.s32.totalorder %v326, 0
        %v328 = vsel %vm327, %v313, 1.0
        %v329 = vmul.f32 %v325, %v328
        %v330 = vld [vmem:[#allocation2] sm:$0x1]
        %v331 = vld [vmem:[%s251] sm:$0xff]
        %v332 = vmul.f32 %v331, %v316
        %vm333 = vcmp.ge.s32.totalorder %v305, 1
        %v334 = vrot.slane %v332, 7
        %v335 = vmul.f32 %v307, %v334
        %v336 = vsel %vm333, %v335, 0.0
        %v337 = vadd.f32 %v332, %v336
        %vm338 = vcmp.ge.s32.totalorder %v305, 2
        %v339 = vrot.slane %v337, 6
        %v340 = vmul.f32 %v310, %v339
        %v341 = vsel %vm338, %v340, 0.0
        %v342 = vadd.f32 %v337, %v341
        %vm343 = vcmp.ge.s32.totalorder %v305, 4
        %v344 = vrot.slane %v342, 4
        %v345 = vmul.f32 %v313, %v344
        %v346 = vsel %vm343, %v345, 0.0
        %v347 = vadd.f32 %v342, %v346
        %v349 = vperm.slane %v330, 0
        %v351 = vmul.f32 %v329, %v349
        %v352 = vadd.f32 %v351, %v347
        %353 = vst [vmem:[%s282] sm:$0xff] %v352
        %v354 = vmul.f32 %v303, %v330
        %356 = vst [vmem:[#allocation1] sm:$0xff] %v347
        %s357 = scalar_lea.vmem [#allocation1], 7
        %v358 = vld [vmem:[%s357] ss:$9 sm:$0xff]
        %v360 = vadd.f32 %v354, %v358
        %s361 = scalar_lea.vmem %s251, 8 [#allocation8]
        %v362 = vld [vmem:[%s361] sm:$0xff]
        %v363 = vmul.f32 %v362, %v316
        %v364 = vrot.slane %v363, 7
        %v365 = vmul.f32 %v307, %v364
        %v366 = vsel %vm333, %v365, 0.0
        %v367 = vadd.f32 %v363, %v366
        %v368 = vrot.slane %v367, 6
        %v369 = vmul.f32 %v310, %v368
        %v370 = vsel %vm338, %v369, 0.0
        %v371 = vadd.f32 %v367, %v370
        %v372 = vrot.slane %v371, 4
        %v373 = vmul.f32 %v313, %v372
        %v374 = vsel %vm343, %v373, 0.0
        %v375 = vadd.f32 %v371, %v374
        %v377 = vperm.slane %v360, 0
        %v379 = vmul.f32 %v329, %v377
        %v380 = vadd.f32 %v379, %v375
        %s381 = scalar_lea.vmem %s282, 8 [#allocation9]
        %382 = vst [vmem:[%s381] sm:$0xff] %v380
        %v383 = vmul.f32 %v303, %v360
        %385 = vst [vmem:[#allocation1] sm:$0xff] %v375
        %s386 = scalar_lea.vmem [#allocation1], 7
        %v387 = vld [vmem:[%s386] ss:$9 sm:$0xff]
        %v389 = vadd.f32 %v383, %v387
        %390 = vst [vmem:[#allocation2] sm:$0x1] %v389
        %s391 = sand.u32 %s125, 1
        %s392 = scalar_lea.sflag [#allocation5], %s391
        %s393 = sand.u32 %s125, 1
        %s394 = smul.addr %s393, 16
        %s395 = scalar_lea.vmem [#allocation9], %s394
        // Predicated region
        $region49: #{tpu_custom_call.1} parent=31 // pred_check
          %p396 = pneg %p135
        $region50: #{tpu_custom_call.1} parent=31 // pred_check_branch
          %398 = sbr.rel (%p396) target = $region52
        $region51: #{tpu_custom_call.1} parent=31 // pred_region
          %s399 = smul.u32 2, %s28
          %s400 = ssub.s32 3, %s399
          %p401 = scmp.lt.s32.totalorder %s400, 2
          %s402 = scalar_select %p401, %s400, 2
          %s403 = smul.u32 8, %s402
          %s404 = ssub.s32 16, %s403
          %s405 = sshll.u32 %s404, 4
          %406 = vsyncadd %s392, %s405
          %p407 = scmp.ne.s32.totalorder 0, %s403
          %s408 = smul.addr %s399, 2
          %s409 = sadd.s32 %s27, %s408
          %s410 = smul.addr %s409, 8
          %s411 = scalar_lea.hbm %s3, %s410
          %s412 = smul.u32 8, %s402
          %s413 = sshll.u32 %s395, 4
          %s414 = int_to_ptr.vmem [resolvable:$true] %s413
          %s415 = sshll.u32 %s411, 4
          %s416 = int_to_ptr.hbm [resolvable:$true] %s415
          %s417 = sshll.u32 %s412, 4
          %421 = dma.vmem_to_hbm [thread:$0]  (%p407), %s414, %s417, %s416, %s392, 128, 256, 8
        $region52: #{tpu_custom_call.1} parent=31 // pred_fallthru
          _
      $region32: #{tpu_custom_call.1} parent=5 // pred_fallthru
        _
      %p422 = scmp.le.s32.totalorder 2, %s18
      // Predicated region
      $region53: #{tpu_custom_call.1} parent=5 // pred_check
        %p423 = pneg %p422
      $region54: #{tpu_custom_call.1} parent=5 // pred_check_branch
        %425 = sbr.rel (%p423) target = $region56
      $region55: #{tpu_custom_call.1} parent=5 // pred_region
        %s426 = ssub.s32 %s18, 2
        // Predicated region
        $region57: #{tpu_custom_call.1} parent=55 // pred_check
          %p427 = pneg %p141
        $region58: #{tpu_custom_call.1} parent=55 // pred_check_branch
          %429 = sbr.rel (%p427) target = $region60
        $region59: #{tpu_custom_call.1} parent=55 // pred_region
          %s430 = sand.u32 %s126, 1
          %s431 = scalar_lea.sflag [#allocation5], %s430
          %s432 = sand.u32 %s126, 1
          %s433 = smul.addr %s432, 16
          %s434 = scalar_lea.vmem [#allocation9], %s433
          %436 = dma.done %s431, 256
        $region60: #{tpu_custom_call.1} parent=55 // pred_fallthru
          _
      $region56: #{tpu_custom_call.1} parent=5 // pred_fallthru
        _
    $region6: #{tpu_custom_call.1} parent=1 // loop_footer
      %s22 = sadd.s32 1, %s18
    $region7: #{tpu_custom_call.1} parent=1 // loop_footer_branch
      %17 = sbr.rel target = $region3
    $region8: #{tpu_custom_call.1} parent=1 // loop_exit
      _
    %437 = vsyncpa [#allocation4], 1
    %s438 = scalar_lea.sflag [#allocation4], 1
    %439 = vsyncpa %s438, 1
    %440 = vsyncpa [#allocation7], 1
    %s441 = scalar_lea.sflag [#allocation7], 1
    %442 = vsyncpa %s441, 1
    %443 = vsyncpa [#allocation5], 1
    %s444 = scalar_lea.sflag [#allocation5], 1
    %445 = vsyncpa %s444, 1

</llo_original>
